<compile_context>
chip_gen: v7x
topology: tpu7x:2x2x1
jax: 0.10.0
libtpu: 0.0.40
codegen_flags: <defaults>
</compile_context>

<pallas_src>
import jax
import jax.numpy as jnp
from jax import lax
from jax.experimental import pallas as pl
from jax.experimental.pallas import tpu as pltpu


def linear_sigmoid_kernel(x_ref, w_ref, b_ref, o_ref):
    # x_ref: (rows, H1), w_ref: (H2, H1)  [PyTorch layout, lane-dense],
    # b_ref: (1, H2),   o_ref: (rows, H2)
    # Contract x's feature dim with W's last dim (i.e. x @ W.T) on the MXU.
    acc = lax.dot_general(
        x_ref[...], w_ref[...],
        dimension_numbers=(((1,), (1,)), ((), ())),
        preferred_element_type=jnp.float32,
    )
    acc = acc + b_ref[...]                       # broadcast (1, H2) over rows
    o_ref[...] = jax.nn.sigmoid(acc).astype(o_ref.dtype)


def linear_module_forward(x, weight, bias, *, row_tile=256):
    """sigmoid(x @ weight.T + bias), weight in nn.Linear (out, in) layout."""
    B, H1 = x.shape
    H2, H1_w = weight.shape
    assert H1 == H1_w, (H1, H1_w)
    b2d = bias.reshape(1, H2)                    # keep 2-D for TPU layout

    cost = pl.CostEstimate(
        flops=2 * B * H1 * H2,
        bytes_accessed=4 * (B * H1 + H2 * H1 + H2 + B * H2),
        transcendentals=B * H2,
    )
    # NOTE: on v6e/v7x, casting x/weight to bf16 for the matmul (keeping the f32
    # accumulate + f32 epilogue) roughly halves MXU cycles if the consumer
    # tolerates bf16 GEMM precision; kept f32 here for exact parity with torch.

    if B <= row_tile:
        # Overhead-minimal path: no grid, no pipeline bookkeeping; whole
        # operands (<< 1 MiB total) live in VMEM for the single invocation.
        return pl.pallas_call(
            linear_sigmoid_kernel,
            out_shape=jax.ShapeDtypeStruct((B, H2), jnp.float32),
            in_specs=[
                pl.BlockSpec(memory_space=pltpu.MemorySpace.VMEM),
                pl.BlockSpec(memory_space=pltpu.MemorySpace.VMEM),
                pl.BlockSpec(memory_space=pltpu.MemorySpace.VMEM),
            ],
            out_specs=pl.BlockSpec(memory_space=pltpu.MemorySpace.VMEM),
            cost_estimate=cost,
        )(x, weight, b2d)

    # Batch-tiled path: grid over row tiles; W and bias use constant index_maps
    # so they stay VMEM-resident across grid steps; batch axis is "parallel"
    # (sharded across v7x's two TensorCores).
    n_tiles = pl.cdiv(B, row_tile)
    Bp = n_tiles * row_tile
    if Bp != B:
        x = jnp.pad(x, ((0, Bp - B), (0, 0)))

    out = pl.pallas_call(
        linear_sigmoid_kernel,
        out_shape=jax.ShapeDtypeStruct((Bp, H2), jnp.float32),
        grid=(n_tiles,),
        in_specs=[
            pl.BlockSpec((row_tile, H1), lambda i: (i, 0)),
            pl.BlockSpec((H2, H1), lambda i: (0, 0)),
            pl.BlockSpec((1, H2), lambda i: (0, 0)),
        ],
        out_specs=pl.BlockSpec((row_tile, H2), lambda i: (i, 0)),
        compiler_params=pltpu.CompilerParams(
            dimension_semantics=("parallel",),
        ),
        cost_estimate=cost,
    )(x, weight, b2d)
    return out[:B]


if __name__ == "__main__":
    # LinearModule: hidden_size1=128 -> hidden_size2=64, then Sigmoid.
    H1, H2 = 128, 64

    key = jax.random.PRNGKey(0)
    kx, kw, kb, kx2 = jax.random.split(key, 4)

    bound = 1.0 / (H1 ** 0.5)
    weight = jax.random.uniform(kw, (H2, H1), minval=-bound, maxval=bound,
                                dtype=jnp.float32)
    bias = jax.random.uniform(kb, (H2,), minval=-bound, maxval=bound,
                              dtype=jnp.float32)

    # Small batch -> gridless, overhead-minimal path.
    B_small = 8
    x_small = jax.random.normal(kx, (B_small, H1), dtype=jnp.float32)
    out_small = jax.block_until_ready(linear_module_forward(x_small, weight, bias))
    ref_small = jax.nn.sigmoid(x_small @ weight.T + bias)
    assert out_small.shape == (B_small, H2)
    assert jnp.allclose(out_small, ref_small, atol=1e-5, rtol=1e-5)

    # Larger batch (incl. a ragged tile) -> batch-tiled, megacore-parallel path.
    B_big = 520
    x_big = jax.random.normal(kx2, (B_big, H1), dtype=jnp.float32)
    out_big = jax.block_until_ready(linear_module_forward(x_big, weight, bias))
    ref_big = jax.nn.sigmoid(x_big @ weight.T + bias)
    assert out_big.shape == (B_big, H2)
    assert jnp.allclose(out_big, ref_big, atol=1e-5, rtol=1e-5)

    print("KERNEL_OK")
</pallas_src>

<mosaic_0001>
module attributes {stable_mosaic.version = 11 : i64} {
  func.func @linear_sigmoid_kernel(%arg0: memref<8x128xf32, #tpu.memory_space<vmem>>, %arg1: memref<64x128xf32, #tpu.memory_space<vmem>>, %arg2: memref<1x64xf32, #tpu.memory_space<vmem>>, %arg3: memref<8x64xf32, #tpu.memory_space<vmem>>) attributes {dimension_semantics = [], scalar_prefetch = 0 : i64, scratch_operands = 0 : i64, tpu.core_type = #tpu.core_type<tc>} {
    %c0 = arith.constant 0 : index
    %c0_0 = arith.constant 0 : index
    %0 = vector.load %arg0[%c0, %c0_0] : memref<8x128xf32, #tpu.memory_space<vmem>>, vector<8x128xf32>
    %c0_1 = arith.constant 0 : index
    %c0_2 = arith.constant 0 : index
    %1 = vector.load %arg1[%c0_1, %c0_2] : memref<64x128xf32, #tpu.memory_space<vmem>>, vector<64x128xf32>
    %cst = arith.constant dense<0.000000e+00> : vector<8x64xf32>
    %2 = tpu.matmul %0, %1, %cst {dimension_numbers = #tpu.dot_dimension_numbers<[1], [1], [0], [0], [0, 0, 1, 0], [], []>} : vector<8x128xf32>, vector<64x128xf32>, vector<8x64xf32> -> vector<8x64xf32>
    %c0_3 = arith.constant 0 : index
    %c0_4 = arith.constant 0 : index
    %3 = vector.load %arg2[%c0_3, %c0_4] : memref<1x64xf32, #tpu.memory_space<vmem>>, vector<1x64xf32>
    %4 = vector.broadcast %3 : vector<1x64xf32> to vector<8x64xf32>
    %5 = arith.addf %2, %4 : vector<8x64xf32>
    %6 = arith.negf %5 : vector<8x64xf32>
    %7 = math.exp %6 : vector<8x64xf32>
    %cst_5 = arith.constant 1.000000e+00 : f32
    %8 = vector.broadcast %cst_5 : f32 to vector<8x64xf32>
    %9 = arith.addf %8, %7 : vector<8x64xf32>
    %10 = arith.divf %8, %9 : vector<8x64xf32>
    %c0_6 = arith.constant 0 : index
    %c0_7 = arith.constant 0 : index
    %11 = vector.load %arg3[%c0_6, %c0_7] : memref<8x64xf32, #tpu.memory_space<vmem>>, vector<8x64xf32>
    tpu.vector_store %arg3[%c0_6, %c0_7], %10 {strides = array<i32>} : memref<8x64xf32, #tpu.memory_space<vmem>>, vector<8x64xf32>,
    return
  }
}

</mosaic_0001>

<llo_original>
// kernel: tpu_custom_call.1
$region0: #{tpu_custom_call.1}
  #allocation0 [shape = 'u32[]', space=smem, size = 0x4, offset = 0x4, fixed_abs, tag = 'smem constant byte address 0x4 - core index']
  #allocation1 [shape = 'u32[144,128]{1,0:T(1,128)}', space=vmem, size = 0x12000, scoped, tag = 'internal scratch']
  %s0 = inlined_call_operand.hbm [shape: f32[8,128], index: 0, kind: input, shape index: {}]
  %s1 = inlined_call_operand.hbm [shape: f32[64,128], index: 1, kind: input, shape index: {}]
  %s2 = inlined_call_operand.vmem [shape: f32[1,64], index: 2, kind: input, shape index: {}]
  %s3 = inlined_call_operand.hbm [shape: f32[8,64], index: 3, kind: output, shape index: {}]
  %s4 = sld [smem:[#allocation0]]
  $region30: #{tpu_custom_call.1} parent=0
    _
  %s6 = ssub.s32 1, %s4
  %s7 = scalar_select 0, %s6, %s4
  $region1: #{tpu_custom_call.1} parent=0
    #allocation2 [shape = 'u8[4096]{0}', space=vmem, size = 0x1000, scoped, tag = 'input window, operand 0, single buffered']
    #allocation3 [shape = 's32[1]{0}', space=sflag, size = 0x4, scoped, tag = 'scoped memory for tpu_custom_call.1']
    #allocation4 [shape = 's32[1]{0}', space=sflag, size = 0x4, scoped, tag = 'scoped memory for tpu_custom_call.1']
    #allocation5 [shape = 'u8[32768]{0}', space=vmem, size = 0x8000, scoped, tag = 'input window, operand 1, single buffered']
    #allocation6 [shape = 's32[1]{0}', space=sflag, size = 0x4, scoped, tag = 'scoped memory for tpu_custom_call.1']
    #allocation7 [shape = 'u8[4096]{0}', space=vmem, size = 0x1000, scoped, tag = 'output window, operand 0, single buffered']
    %8 = vsyncpa [#allocation3], 0
    %9 = vsyncpa [#allocation6], 0
    %10 = vsyncpa [#allocation4], 0
    // Predicated region
    $region2: #{tpu_custom_call.1} parent=1 // pred_check
      _
    $region3: #{tpu_custom_call.1} parent=1 // pred_check_branch
      %12 = sbr.rel (0) target = $region5
    $region4: #{tpu_custom_call.1} parent=1 // pred_region
      %s14 = ssub.s32 128, 128
      %15 = vsyncadd [#allocation3], %s14
      %s17 = sshll.u32 [#allocation2], 4
      %s18 = int_to_ptr.vmem [resolvable:$true] %s17
      %20 = dma.hbm_to_vmem [thread:$0]  %s0, 128, %s18, [#allocation3]
    $region5: #{tpu_custom_call.1} parent=1 // pred_fallthru
      _
    // Predicated region
    $region6: #{tpu_custom_call.1} parent=1 // pred_check
      _
    $region7: #{tpu_custom_call.1} parent=1 // pred_check_branch
      %22 = sbr.rel (0) target = $region9
    $region8: #{tpu_custom_call.1} parent=1 // pred_region
      %s24 = ssub.s32 1024, 1024
      %25 = vsyncadd [#allocation6], %s24
      %s26 = sshll.u32 [#allocation5], 4
      %s27 = int_to_ptr.vmem [resolvable:$true] %s26
      %32 = dma.hbm_to_vmem [thread:$0]  %s1, 1024, %s27, [#allocation6], 128, 128, 8
    $region9: #{tpu_custom_call.1} parent=1 // pred_fallthru
      _
    // Predicated region
    $region10: #{tpu_custom_call.1} parent=1 // pred_check
      _
    $region11: #{tpu_custom_call.1} parent=1 // pred_check_branch
      %34 = sbr.rel (0) target = $region13
    $region12: #{tpu_custom_call.1} parent=1 // pred_region
      _
    $region13: #{tpu_custom_call.1} parent=1 // pred_fallthru
      _
    // Predicated region
    $region14: #{tpu_custom_call.1} parent=1 // pred_check
      _
    $region15: #{tpu_custom_call.1} parent=1 // pred_check_branch
      %36 = sbr.rel (0) target = $region17
    $region16: #{tpu_custom_call.1} parent=1 // pred_region
      %37 = dma.done [#allocation3], 128
    $region17: #{tpu_custom_call.1} parent=1 // pred_fallthru
      _
    // Predicated region
    $region18: #{tpu_custom_call.1} parent=1 // pred_check
      _
    $region19: #{tpu_custom_call.1} parent=1 // pred_check_branch
      %39 = sbr.rel (0) target = $region21
    $region20: #{tpu_custom_call.1} parent=1 // pred_region
      %40 = dma.done [#allocation6], 1024
    $region21: #{tpu_custom_call.1} parent=1 // pred_fallthru
      _
    %v41 = vld [vmem:[#allocation2] sm:$0xff]
    %v42 = vld [vmem:[#allocation5] sm:$0xff]
    %v43 = vld [vmem:[#allocation5 + $0x8] sm:$0xff]
    %v44 = vld [vmem:[#allocation5 + $0x10] sm:$0xff]
    %v45 = vld [vmem:[#allocation5 + $0x18] sm:$0xff]
    %v46 = vld [vmem:[#allocation5 + $0x20] sm:$0xff]
    %v47 = vld [vmem:[#allocation5 + $0x28] sm:$0xff]
    %v48 = vld [vmem:[#allocation5 + $0x30] sm:$0xff]
    %v49 = vld [vmem:[#allocation5 + $0x38] sm:$0xff]
    %v50 = vld [vmem:[%s2] sm:$0x1]
    %v52 = vlaneseq
    %v53 = vshrl.u32 %v52, 7
    %v54 = vsub.s32 0, %v53
    %v55 = vrot.slane %v50, %v54
    %57 = vmatprep.subr.mxu0 0.0
    %58 = vmatpush1.xpose.msra.mxu0 %v42
    %59 = vmatprep.subr.mxu0 0.0
    %60 = vmatpush1.xpose.msra.mxu0 %v43
    %61 = vmatprep.subr.mxu0 0.0
    %62 = vmatpush1.xpose.msra.mxu0 %v44
    %63 = vmatprep.subr.mxu0 0.0
    %64 = vmatpush1.xpose.msra.mxu0 %v45
    %65 = vmatprep.subr.mxu0 0.0
    %66 = vmatpush1.xpose.msra.mxu0 %v46
    %67 = vmatprep.subr.mxu0 0.0
    %68 = vmatpush1.xpose.msra.mxu0 %v47
    %69 = vmatprep.subr.mxu0 0.0
    %70 = vmatpush1.xpose.msra.mxu0 %v48
    %71 = vmatprep.subr.mxu0 0.0
    %72 = vmatpush1.xpose.msra.mxu0 %v49
    %73 = vmatprep.subr.mxu0 0.0
    %74 = vmatpush1.xpose.msra.mxu0 0.0
    %75 = vmatprep.subr.mxu0 0.0
    %76 = vmatpush1.xpose.msra.mxu0 0.0
    %77 = vmatprep.subr.mxu0 0.0
    %78 = vmatpush1.xpose.msra.mxu0 0.0
    %79 = vmatprep.subr.mxu0 0.0
    %80 = vmatpush1.xpose.msra.mxu0 0.0
    %81 = vmatprep.subr.mxu0 0.0
    %82 = vmatpush1.xpose.msra.mxu0 0.0
    %83 = vmatprep.subr.mxu0 0.0
    %84 = vmatpush1.xpose.msra.mxu0 0.0
    %85 = vmatprep.subr.mxu0 0.0
    %86 = vmatpush1.xpose.msra.mxu0 0.0
    %87 = vmatprep.subr.mxu0 0.0
    %88 = vmatpush1.xpose.msra.mxu0 0.0
    %89 = vmatprep.subr.mxu0 0.0
    %90 = vmatpush1.xpose.msra.mxu0 0.0
    %91 = vmatprep.subr.mxu0 0.0
    %92 = vmatpush1.xpose.msra.mxu0 0.0
    %93 = vmatprep.subr.mxu0 0.0
    %94 = vmatpush1.xpose.msra.mxu0 0.0
    %95 = vmatprep.subr.mxu0 0.0
    %96 = vmatpush1.xpose.msra.mxu0 0.0
    %97 = vmatprep.subr.mxu0 0.0
    %98 = vmatpush1.xpose.msra.mxu0 0.0
    %99 = vmatprep.subr.mxu0 0.0
    %100 = vmatpush1.xpose.msra.mxu0 0.0
    %101 = vmatprep.subr.mxu0 0.0
    %102 = vmatpush1.xpose.msra.mxu0 0.0
    %103 = vmatprep.subr.mxu0 0.0
    %104 = vmatpush1.xpose.msra.mxu0 0.0
    %105 = vmatprep.subr.mxu0 0.0
    %106 = vmatpush1.xpose.msra.mxu0 0.0
    %107 = vmatprep.subr.mxu0 0.0
    %108 = vmatpush1.xpose.msra.mxu0 0.0
    %109 = vmatprep.subr.mxu0 0.0
    %110 = vmatpush1.xpose.msra.mxu0 0.0
    %111 = vmatprep.subr.mxu0 0.0
    %112 = vmatpush1.xpose.msra.mxu0 0.0
    %113 = vmatprep.subr.mxu0 0.0
    %114 = vmatpush1.xpose.msra.mxu0 0.0
    %115 = vmatprep.subr.mxu0 0.0
    %116 = vmatpush1.xpose.msra.mxu0 0.0
    %117 = vmatprep.subr.mxu0 0.0
    %118 = vmatpush1.xpose.msra.mxu0 0.0
    %119 = vmatprep.subr.mxu0 0.0
    %120 = vmatpush1.xpose.msra.mxu0 0.0
    %121 = vmatprep.mubr.f32.mxu0 0.0
    %122 = vmatmul.mubr.f32.gmra.mrb[0].mxu0 %v41
    %v123 = vpop.f32.mrb[0].mxu0
    %v124 = vadd.f32 %v55, %v123
    %v125 = vpop.f32.mrb[0].mxu0
    %126 = vdwg.mxu0
    %v127 = vxor.u32 %v124, 2147483648
    %v128 = vmul.f32 %v127, 1.442695
    %v129 = vpow.pop %v128
    %v130 = vadd.f32 %v129, 1.0
    %v131 = vrcp.pop %v130
    %v132 = vmul.f32 1.0, %v131
    %vm133 = vcmask 523264
    %134 = vst.msk [vmem:[#allocation7] sm:$0xff] %vm133, %v132
    // Predicated region
    $region22: #{tpu_custom_call.1} parent=1 // pred_check
      _
    $region23: #{tpu_custom_call.1} parent=1 // pred_check_branch
      %136 = sbr.rel (0) target = $region25
    $region24: #{tpu_custom_call.1} parent=1 // pred_region
      %s138 = ssub.s32 128, 128
      %139 = vsyncadd [#allocation4], %s138
      %s141 = sshll.u32 [#allocation7], 4
      %s142 = int_to_ptr.vmem [resolvable:$true] %s141
      %144 = dma.vmem_to_hbm [thread:$0]  %s142, 128, %s3, [#allocation4]
    $region25: #{tpu_custom_call.1} parent=1 // pred_fallthru
      _
    // Predicated region
    $region26: #{tpu_custom_call.1} parent=1 // pred_check
      _
    $region27: #{tpu_custom_call.1} parent=1 // pred_check_branch
      %146 = sbr.rel (0) target = $region29
    $region28: #{tpu_custom_call.1} parent=1 // pred_region
      %147 = dma.done [#allocation4], 128
    $region29: #{tpu_custom_call.1} parent=1 // pred_fallthru
      _
    %148 = vsyncpa [#allocation3], 1
    %149 = vsyncpa [#allocation6], 1
    %150 = vsyncpa [#allocation4], 1

</llo_original>
